<compile_context>
chip_gen: v7x
topology: tpu7x:2x2x1
jax: 0.10.0
libtpu: 0.0.40
codegen_flags: <defaults>
</compile_context>

<pallas_src>
import math

import jax
import jax.numpy as jnp
from jax.experimental import pallas as pl
from jax.experimental.pallas import tpu as pltpu


# ---------------------------------------------------------------------------
# Buffer setup (mirrors nn.Module.__init__)
# ---------------------------------------------------------------------------
def make_positional_encoding_table(emb_dim: int, max_len: int = 5000) -> jnp.ndarray:
    position = jnp.arange(0, max_len, dtype=jnp.float32)[:, None]            # (max_len, 1)
    div_term = jnp.exp(
        jnp.arange(0, emb_dim, 2, dtype=jnp.float32) * (-math.log(10000.0) / emb_dim)
    )                                                                         # (emb_dim//2,)
    pe = jnp.zeros((max_len, emb_dim), dtype=jnp.float32)
    pe = pe.at[:, 0::2].set(jnp.sin(position * div_term))
    pe = pe.at[:, 1::2].set(jnp.cos(position * div_term))
    return pe[:, None, :]                                                     # (max_len, 1, emb_dim)


# ---------------------------------------------------------------------------
# Tile planning
# ---------------------------------------------------------------------------
def _sublane_granularity(dtype) -> int:
    # vreg packs 8 f32 / 16 bf16 / 32 int8 rows per sublane group.
    return {4: 8, 2: 16, 1: 32}.get(jnp.dtype(dtype).itemsize, 8)


def _plan_tiles(seq_len, batch, emb_dim, itemsize, sub,
                target_x_tile_bytes=6 << 20, vmem_budget_bytes=28 << 20):
    """Pick (seq-rows per tile, batches per column tile).

    Double-buffered VMEM per step ~= 2 * ts * (2*cb*emb + emb) * itemsize.
    Target ~6 MiB x tiles; keep the total under ~28 MiB so the 32 MiB scoped
    limit is honoured on every generation (v7x has only 64 MiB physical VMEM).
    """
    pe_row = emb_dim * itemsize

    def pick_ts(cb):
        x_row = cb * emb_dim * itemsize
        ts = min(target_x_tile_bytes // max(x_row, 1),
                 vmem_budget_bytes // max(2 * (2 * x_row + pe_row), 1))
        return (int(ts) // sub) * sub

    # Prefer no column split (widest, maximally lane-dense stores); only split
    # over batch - on 128-lane-aligned boundaries - when even `sub` rows of a
    # full-width tile would blow the VMEM budget.
    candidates = [batch] + [cb for cb in range(batch - 1, 0, -1)
                            if batch % cb == 0 and (cb * emb_dim) % 128 == 0]
    for cb in candidates:
        ts = pick_ts(cb)
        if ts >= seq_len:
            return seq_len, cb          # whole seq fits in one (or few) steps
        if ts >= sub:
            return ts, cb
    # TODO(synk): pathological batch*emb with no 128-aligned batch split; fall
    # back to the minimal tile (may require raising the vmem limit).
    return min(sub, seq_len), batch


# ---------------------------------------------------------------------------
# Forward: x (S, B, E) + pe (max_len, 1, E) broadcast over batch
# ---------------------------------------------------------------------------
def positional_encoding_forward(x: jnp.ndarray, pe: jnp.ndarray, *, tile_seq=None) -> jnp.ndarray:
    seq_len, batch, emb_dim = x.shape
    max_len = pe.shape[0]
    if pe.shape[-1] != emb_dim:
        raise ValueError("pe table emb_dim mismatch")
    if seq_len > max_len:
        raise ValueError(f"seq_len={seq_len} exceeds positional table max_len={max_len}")

    itemsize = jnp.dtype(x.dtype).itemsize
    sub = _sublane_granularity(x.dtype)

    # Host-side, one-time: free 2D views + cast pe to x.dtype (halves pe DMA
    # bytes for bf16 and avoids per-element casts on v5e's no-bf16 VALU).
    x2d = x.reshape(seq_len, batch * emb_dim)
    pe2d = pe.reshape(max_len, emb_dim).astype(x.dtype)

    if tile_seq is not None:
        if tile_seq < seq_len and tile_seq % sub != 0:
            raise ValueError(f"tile_seq must be a multiple of {sub} (or >= seq_len)")
        ts, cb = min(tile_seq, seq_len), batch
    else:
        ts, cb = _plan_tiles(seq_len, batch, emb_dim, itemsize, sub)

    n_seq = pl.cdiv(seq_len, ts)
    n_col = batch // cb
    col_w = cb * emb_dim

    def kernel(x_ref, pe_ref, o_ref):
        # x_ref/o_ref: (ts, cb*emb);  pe_ref: (ts, emb)
        if cb == 1:
            o_ref[...] = x_ref[...] + pe_ref[...]
        elif emb_dim % 128 == 0 and cb <= 32:
            # Lane-aligned per-batch slices: unmasked vld/vst.  pe is re-read
            # inside each statement so no wide value stays live across the
            # static unroll (avoids vreg spills).
            for b in range(cb):
                sl = slice(b * emb_dim, (b + 1) * emb_dim)
                o_ref[:, sl] = x_ref[:, sl] + pe_ref[...]
        else:
            # emb not a multiple of 128 (or very large cb): broadcast pe across
            # batch once in-kernel, then a SINGLE full-width unmasked store.
            pe_full = jnp.concatenate([pe_ref[...]] * cb, axis=1)
            o_ref[...] = x_ref[...] + pe_full

    bytes_accessed = (2 * seq_len * batch * emb_dim + seq_len * emb_dim) * itemsize

    out2d = pl.pallas_call(
        kernel,
        out_shape=jax.ShapeDtypeStruct((seq_len, batch * emb_dim), x.dtype),
        grid_spec=pltpu.PrefetchScalarGridSpec(
            num_scalar_prefetch=0,
            grid=(n_seq, n_col),
            in_specs=[
                pl.BlockSpec((ts, col_w), lambda i, j: (i, j)),
                pl.BlockSpec((ts, emb_dim), lambda i, j: (i, 0)),
            ],
            out_specs=pl.BlockSpec((ts, col_w), lambda i, j: (i, j)),
        ),
        compiler_params=pltpu.CompilerParams(
            # Independent tiles; "parallel" lets the v7x runtime shard the grid
            # across both TensorCores.  TODO(synk): if a v7x profile shows one
            # TC doing all steps, switch to an explicit core axis.
            dimension_semantics=("parallel", "parallel"),
            vmem_limit_bytes=32 << 20,   # safe on v5e/v6e/v7x; planner keeps use <= ~28 MiB
        ),
        cost_estimate=pl.CostEstimate(
            flops=seq_len * batch * emb_dim,
            transcendentals=0,
            bytes_accessed=bytes_accessed,
        ),
    )(x2d, pe2d)

    return out2d.reshape(seq_len, batch, emb_dim)


# ---------------------------------------------------------------------------
# Demo / correctness checks
# ---------------------------------------------------------------------------
if __name__ == "__main__":
    # Demo 1: pipelined seq grid, 128-aligned emb -> per-batch aligned-slice path.
    S, B, E, L = 32, 2, 128, 128
    x = jax.random.normal(jax.random.PRNGKey(0), (S, B, E), dtype=jnp.float32)
    pe = make_positional_encoding_table(E, max_len=L)
    out = jax.block_until_ready(positional_encoding_forward(x, pe, tile_seq=8))   # grid (4, 1)
    ref = x + pe[:S]
    assert out.shape == (S, B, E)
    assert jnp.allclose(out, ref, atol=1e-6, rtol=1e-6)

    # Demo 2: small non-128 emb -> single full-width store via lane-concat path.
    S2, B2, E2, L2 = 8, 2, 32, 64
    x2 = jax.random.normal(jax.random.PRNGKey(0), (S2, B2, E2), dtype=jnp.float32)
    pe2 = make_positional_encoding_table(E2, max_len=L2)
    out2 = jax.block_until_ready(positional_encoding_forward(x2, pe2))
    assert jnp.allclose(out2, x2 + pe2[:S2], atol=1e-6, rtol=1e-6)

    # Demo 3: ragged last seq tile (seq_len not a multiple of the tile).
    S3, B3, E3, L3 = 20, 2, 128, 64
    x3 = jax.random.normal(jax.random.PRNGKey(0), (S3, B3, E3), dtype=jnp.float32)
    pe3 = make_positional_encoding_table(E3, max_len=L3)
    out3 = jax.block_until_ready(positional_encoding_forward(x3, pe3, tile_seq=8))  # grid (3, 1)
    assert jnp.allclose(out3, x3 + pe3[:S3], atol=1e-6, rtol=1e-6)

    # Demo 4: bf16 x; pe cast to bf16 once on the host, add stays in bf16.
    S4, B4, E4, L4 = 16, 2, 128, 64
    x4 = jax.random.normal(jax.random.PRNGKey(0), (S4, B4, E4), dtype=jnp.bfloat16)
    pe4 = make_positional_encoding_table(E4, max_len=L4)
    out4 = jax.block_until_ready(positional_encoding_forward(x4, pe4))
    ref4 = x4 + pe4[:S4].astype(jnp.bfloat16)
    assert out4.dtype == jnp.bfloat16
    assert jnp.allclose(out4.astype(jnp.float32), ref4.astype(jnp.float32),
                        atol=2e-2, rtol=2e-2)

    print("KERNEL_OK")
</pallas_src>

<mosaic_0001>
module attributes {stable_mosaic.version = 11 : i64} {
  func.func @kernel(%arg0: i32, %arg1: i32, %arg2: memref<8x256xf32, #tpu.memory_space<vmem>>, %arg3: memref<8x128xf32, #tpu.memory_space<vmem>>, %arg4: memref<8x256xf32, #tpu.memory_space<vmem>>) attributes {dimension_semantics = [#tpu.dimension_semantics<parallel>, #tpu.dimension_semantics<parallel>], iteration_bounds = array<i64: 4, 1>, scalar_prefetch = 0 : i64, scratch_operands = 0 : i64, tpu.core_type = #tpu.core_type<tc>, window_params = [{transform_indices = @transform_0, window_bounds = array<i64: 8, 256>}, {transform_indices = @transform_1, window_bounds = array<i64: 8, 128>}, {transform_indices = @transform_2, window_bounds = array<i64: 8, 256>}]} {
    %c0 = arith.constant 0 : index
    %c0_0 = arith.constant 0 : index
    %0 = vector.load %arg2[%c0, %c0_0] : memref<8x256xf32, #tpu.memory_space<vmem>>, vector<8x128xf32>
    %c0_1 = arith.constant 0 : index
    %c0_2 = arith.constant 0 : index
    %1 = vector.load %arg3[%c0_1, %c0_2] : memref<8x128xf32, #tpu.memory_space<vmem>>, vector<8x128xf32>
    %2 = arith.addf %0, %1 : vector<8x128xf32>
    %c0_3 = arith.constant 0 : index
    %c0_4 = arith.constant 0 : index
    %3 = vector.load %arg4[%c0_3, %c0_4] : memref<8x256xf32, #tpu.memory_space<vmem>>, vector<8x128xf32>
    tpu.vector_store %arg4[%c0_3, %c0_4], %2 {strides = array<i32>} : memref<8x256xf32, #tpu.memory_space<vmem>>, vector<8x128xf32>,
    %c0_5 = arith.constant 0 : index
    %c128 = arith.constant 128 : index
    %4 = vector.load %arg2[%c0_5, %c128] : memref<8x256xf32, #tpu.memory_space<vmem>>, vector<8x128xf32>
    %c0_6 = arith.constant 0 : index
    %c0_7 = arith.constant 0 : index
    %5 = vector.load %arg3[%c0_6, %c0_7] : memref<8x128xf32, #tpu.memory_space<vmem>>, vector<8x128xf32>
    %6 = arith.addf %4, %5 : vector<8x128xf32>
    %c0_8 = arith.constant 0 : index
    %c128_9 = arith.constant 128 : index
    %7 = vector.load %arg4[%c0_8, %c128_9] : memref<8x256xf32, #tpu.memory_space<vmem>>, vector<8x128xf32>
    tpu.vector_store %arg4[%c0_8, %c128_9], %6 {strides = array<i32>} : memref<8x256xf32, #tpu.memory_space<vmem>>, vector<8x128xf32>,
    return
  }
  func.func @transform_0(%arg0: i32, %arg1: i32) -> (i32, i32) {
    %c0_i32 = arith.constant 0 : i32
    return %arg0, %arg1 : i32, i32
  }
  func.func @transform_1(%arg0: i32, %arg1: i32) -> (i32, i32) {
    %c0_i32 = arith.constant 0 : i32
    %c0_i32_0 = arith.constant 0 : i32
    return %arg0, %c0_i32 : i32, i32
  }
  func.func @transform_2(%arg0: i32, %arg1: i32) -> (i32, i32) {
    %c0_i32 = arith.constant 0 : i32
    return %arg0, %arg1 : i32, i32
  }
}

</mosaic_0001>

<llo_original>
// kernel: tpu_custom_call.1
$region0: #{tpu_custom_call.1}
  #allocation0 [shape = 'u32[]', space=smem, size = 0x4, offset = 0x4, fixed_abs, tag = 'smem constant byte address 0x4 - core index']
  #allocation1 [shape = 'u32[144,128]{1,0:T(1,128)}', space=vmem, size = 0x12000, scoped, tag = 'internal scratch']
  %s0 = inlined_call_operand.hbm [shape: f32[32,256], index: 0, kind: input, shape index: {}]
  %s1 = inlined_call_operand.hbm [shape: f32[128,128], index: 1, kind: input, shape index: {}]
  %s2 = inlined_call_operand.hbm [shape: f32[32,256], index: 2, kind: output, shape index: {}]
  %s3 = sld [smem:[#allocation0]]
  $region49: #{tpu_custom_call.1} parent=0
    _
  %s5 = ssub.s32 1, %s3
  %s6 = scalar_select 0, %s5, %s3
  $region1: #{tpu_custom_call.1} parent=0
    #allocation2 [shape = 'u8[16384]{0}', space=vmem, size = 0x4000, scoped, tag = 'input window, operand 0']
    #allocation3 [shape = 's32[2]{0}', space=sflag, size = 0x8, scoped, tag = 'scoped memory for tpu_custom_call.1']
    #allocation4 [shape = 's32[2]{0}', space=sflag, size = 0x8, scoped, tag = 'scoped memory for tpu_custom_call.1']
    #allocation5 [shape = 'u8[8192]{0}', space=vmem, size = 0x2000, scoped, tag = 'input window, operand 1']
    #allocation6 [shape = 's32[2]{0}', space=sflag, size = 0x8, scoped, tag = 'scoped memory for tpu_custom_call.1']
    #allocation7 [shape = 'u8[16384]{0}', space=vmem, size = 0x4000, scoped, tag = 'output window, operand 0']
    %7 = vsyncpa [#allocation3], 0
    %s8 = scalar_lea.sflag [#allocation3], 1
    %9 = vsyncpa %s8, 0
    %10 = vsyncpa [#allocation6], 0
    %s11 = scalar_lea.sflag [#allocation6], 1
    %12 = vsyncpa %s11, 0
    %13 = vsyncpa [#allocation4], 0
    %s14 = scalar_lea.sflag [#allocation4], 1
    %15 = vsyncpa %s14, 0
    loop: start=0, step=1, limit=6
    $region2: #{tpu_custom_call.1} parent=1 // loop_pre_header
      _
    $region3: #{tpu_custom_call.1} parent=1 // loop_header
      %s17 = sphi 0, %s21
      %p18 = scmp.ge.s32.totalorder %s17, 6
      %s24 = sphi 0, %s36
      %s25 = sphi 0, %s32
      %s26 = sphi 0, %s24
      %s27 = sphi 0, %s25
      %s28 = sphi 0, %s26
      %s29 = sphi 0, %s27
      %s41 = sphi 0, %s43
      %s44 = sphi 0, %s41
      %s45 = sphi 0, %s44
      %s61 = sphi 0, %s45
      %s67 = sphi 0, %s69
      %s70 = sphi 0, %s67
      %s71 = sphi 0, %s70
      %s87 = sphi 0, %s71
      %s95 = sphi 0, %s97
      %s98 = sphi 0, %s95
      %s99 = sphi 0, %s98
      %s115 = sphi 0, %s99
    $region4: #{tpu_custom_call.1} parent=1 // loop_header_branch
      %20 = sbr.rel (%p18) target = $region8
    $region5: #{tpu_custom_call.1} parent=1 // loop_body
      %s22 = ssub.s32 %s17, 1
      %s23 = ssub.s32 %s17, 2
      %s30 = sadd.s32 1, %s25
      %p31 = scmp.ge.s32.totalorder %s30, 1
      %s32 = scalar_select %p31, 0, %s30
      %s33 = sadd.s32 1, %s24
      %s34 = scalar_select %p31, %s33, %s24
      %p35 = scmp.ge.s32.totalorder %s34, 4
      %s36 = scalar_select %p35, 0, %s34
      %s37 = ssub.s32 %s24, %s36
      %s38 = ssub.s32 %s25, %s32
      %s39 = sor.u32 %s37, %s38
      %p40 = scmp.eq.s32.totalorder %s39, 0
      %s42 = sadd.s32 %s41, 1
      %s43 = scalar_select %p40, %s41, %s42
      %p46 = pneg %p40
      %p47 = scmp.eq.s32.totalorder %s17, 3
      %p48 = por %p46, %p47
      %p49 = scmp.ne.s32.totalorder %s41, %s44
      %p50 = scmp.eq.s32.totalorder %s17, 0
      %p51 = por %p49, %p50
      %p52 = scmp.ne.s32.totalorder %s41, %s44
      %p53 = scmp.eq.s32.totalorder %s22, 3
      %p54 = por %p52, %p53
      %p55 = scmp.ne.s32.totalorder %s44, %s45
      %p56 = scmp.eq.s32.totalorder %s22, 0
      %p57 = por %p55, %p56
      %p58 = scmp.ne.s32.totalorder %s44, %s45
      %p59 = scmp.eq.s32.totalorder %s23, 3
      %p60 = por %p58, %p59
      %p62 = scmp.ne.s32.totalorder %s45, %s61
      %p63 = scmp.eq.s32.totalorder %s23, 0
      %p64 = por %p62, %p63
      %s65 = ssub.s32 %s24, %s36
      %p66 = scmp.eq.s32.totalorder %s65, 0
      %s68 = sadd.s32 %s67, 1
      %s69 = scalar_select %p66, %s67, %s68
      %p72 = pneg %p66
      %p73 = scmp.eq.s32.totalorder %s17, 3
      %p74 = por %p72, %p73
      %p75 = scmp.ne.s32.totalorder %s67, %s70
      %p76 = scmp.eq.s32.totalorder %s17, 0
      %p77 = por %p75, %p76
      %p78 = scmp.ne.s32.totalorder %s67, %s70
      %p79 = scmp.eq.s32.totalorder %s22, 3
      %p80 = por %p78, %p79
      %p81 = scmp.ne.s32.totalorder %s70, %s71
      %p82 = scmp.eq.s32.totalorder %s22, 0
      %p83 = por %p81, %p82
      %p84 = scmp.ne.s32.totalorder %s70, %s71
      %p85 = scmp.eq.s32.totalorder %s23, 3
      %p86 = por %p84, %p85
      %p88 = scmp.ne.s32.totalorder %s71, %s87
      %p89 = scmp.eq.s32.totalorder %s23, 0
      %p90 = por %p88, %p89
      %s91 = ssub.s32 %s24, %s36
      %s92 = ssub.s32 %s25, %s32
      %s93 = sor.u32 %s91, %s92
      %p94 = scmp.eq.s32.totalorder %s93, 0
      %s96 = sadd.s32 %s95, 1
      %s97 = scalar_select %p94, %s95, %s96
      %p100 = pneg %p94
      %p101 = scmp.eq.s32.totalorder %s17, 3
      %p102 = por %p100, %p101
      %p103 = scmp.ne.s32.totalorder %s95, %s98
      %p104 = scmp.eq.s32.totalorder %s17, 0
      %p105 = por %p103, %p104
      %p106 = scmp.ne.s32.totalorder %s95, %s98
      %p107 = scmp.eq.s32.totalorder %s22, 3
      %p108 = por %p106, %p107
      %p109 = scmp.ne.s32.totalorder %s98, %s99
      %p110 = scmp.eq.s32.totalorder %s22, 0
      %p111 = por %p109, %p110
      %p112 = scmp.ne.s32.totalorder %s98, %s99
      %p113 = scmp.eq.s32.totalorder %s23, 3
      %p114 = por %p112, %p113
      %p116 = scmp.ne.s32.totalorder %s99, %s115
      %p117 = scmp.eq.s32.totalorder %s23, 0
      %p118 = por %p116, %p117
      %p119 = scmp.le.s32.totalorder 1, %s17
      %p120 = scmp.lt.s32.totalorder %s17, 5
      %p121 = pnand %p119, %p120
      %p122 = pneg %p121
      // Predicated region
      $region9: #{tpu_custom_call.1} parent=5 // pred_check
        _
      $region10: #{tpu_custom_call.1} parent=5 // pred_check_branch
        %124 = sbr.rel (%p121) target = $region12
      $region11: #{tpu_custom_call.1} parent=5 // pred_region
        %s125 = ssub.s32 %s17, 1
      $region12: #{tpu_custom_call.1} parent=5 // pred_fallthru
        _
      %p126 = scmp.lt.s32.totalorder %s17, 4
      // Predicated region
      $region13: #{tpu_custom_call.1} parent=5 // pred_check
        %p127 = pneg %p126
      $region14: #{tpu_custom_call.1} parent=5 // pred_check_branch
        %129 = sbr.rel (%p127) target = $region16
      $region15: #{tpu_custom_call.1} parent=5 // pred_region
        // Predicated region
        $region17: #{tpu_custom_call.1} parent=15 // pred_check
          %p130 = pneg %p51
        $region18: #{tpu_custom_call.1} parent=15 // pred_check_branch
          %132 = sbr.rel (%p130) target = $region20
        $region19: #{tpu_custom_call.1} parent=15 // pred_region
          %s133 = sand.u32 %s41, 1
          %s134 = scalar_lea.sflag [#allocation3], %s133
          %s135 = sand.u32 %s41, 1
          %s136 = smul.addr %s135, 16
          %s137 = scalar_lea.vmem [#allocation2], %s136
          %s138 = smul.u32 2, %s25
          %s140 = ssub.s32 256, 256
          %141 = vsyncadd %s134, %s140
          %s142 = smul.addr %s24, 2
          %s143 = sadd.s32 %s138, %s142
          %s144 = smul.addr %s143, 128
          %s145 = scalar_lea.hbm %s0, %s144
          %s147 = sshll.u32 %s137, 4
          %s148 = int_to_ptr.vmem [resolvable:$true] %s147
          %150 = dma.hbm_to_vmem [thread:$0]  %s145, 256, %s148, %s134
        $region20: #{tpu_custom_call.1} parent=15 // pred_fallthru
          _
        // Predicated region
        $region21: #{tpu_custom_call.1} parent=15 // pred_check
          %p151 = pneg %p77
        $region22: #{tpu_custom_call.1} parent=15 // pred_check_branch
          %153 = sbr.rel (%p151) target = $region24
        $region23: #{tpu_custom_call.1} parent=15 // pred_region
          %s154 = sand.u32 %s67, 1
          %s155 = scalar_lea.sflag [#allocation6], %s154
          %s156 = sand.u32 %s67, 1
          %s157 = smul.addr %s156, 8
          %s158 = scalar_lea.vmem [#allocation5], %s157
          %s160 = ssub.s32 128, 128
          %161 = vsyncadd %s155, %s160
          %s162 = smul.addr %s24, 128
          %s163 = scalar_lea.hbm %s1, %s162
          %s165 = sshll.u32 %s158, 4
          %s166 = int_to_ptr.vmem [resolvable:$true] %s165
          %168 = dma.hbm_to_vmem [thread:$0]  %s163, 128, %s166, %s155
        $region24: #{tpu_custom_call.1} parent=15 // pred_fallthru
          _
      $region16: #{tpu_custom_call.1} parent=5 // pred_fallthru
        _
      %p169 = scmp.le.s32.totalorder 1, %s17
      %p170 = scmp.lt.s32.totalorder %s17, 5
      %p171 = pnand %p169, %p170
      %p172 = pneg %p171
      // Predicated region
      $region25: #{tpu_custom_call.1} parent=5 // pred_check
        _
      $region26: #{tpu_custom_call.1} parent=5 // pred_check_branch
        %174 = sbr.rel (%p171) target = $region28
      $region27: #{tpu_custom_call.1} parent=5 // pred_region
        %s175 = ssub.s32 %s17, 1
        %s176 = sand.u32 %s44, 1
        %s177 = scalar_lea.sflag [#allocation3], %s176
        %s178 = sand.u32 %s44, 1
        %s179 = smul.addr %s178, 16
        %s180 = scalar_lea.vmem [#allocation2], %s179
        // Predicated region
        $region29: #{tpu_custom_call.1} parent=27 // pred_check
          %p181 = pneg %p57
        $region30: #{tpu_custom_call.1} parent=27 // pred_check_branch
          %183 = sbr.rel (%p181) target = $region32
        $region31: #{tpu_custom_call.1} parent=27 // pred_region
          %184 = dma.done %s177, 256
        $region32: #{tpu_custom_call.1} parent=27 // pred_fallthru
          _
        %s185 = sand.u32 %s70, 1
        %s186 = scalar_lea.sflag [#allocation6], %s185
        %s187 = sand.u32 %s70, 1
        %s188 = smul.addr %s187, 8
        %s189 = scalar_lea.vmem [#allocation5], %s188
        // Predicated region
        $region33: #{tpu_custom_call.1} parent=27 // pred_check
          %p190 = pneg %p83
        $region34: #{tpu_custom_call.1} parent=27 // pred_check_branch
          %192 = sbr.rel (%p190) target = $region36
        $region35: #{tpu_custom_call.1} parent=27 // pred_region
          %193 = dma.done %s186, 128
        $region36: #{tpu_custom_call.1} parent=27 // pred_fallthru
          _
        %s194 = sand.u32 %s44, 1
        %s195 = scalar_lea.sflag [#allocation3], %s194
        %s196 = sand.u32 %s44, 1
        %s197 = smul.addr %s196, 16
        %s198 = scalar_lea.vmem [#allocation2], %s197
        %p199 = pneg %p57
        %p200 = pneg %p54
        %s201 = sand.u32 %s70, 1
        %s202 = scalar_lea.sflag [#allocation6], %s201
        %s203 = sand.u32 %s70, 1
        %s204 = smul.addr %s203, 8
        %s205 = scalar_lea.vmem [#allocation5], %s204
        %p206 = pneg %p83
        %p207 = pneg %p80
        %p208 = pneg %p111
        %p209 = pneg %p108
        %s210 = sand.u32 %s98, 1
        %s211 = scalar_lea.sflag [#allocation4], %s210
        %s212 = sand.u32 %s98, 1
        %s213 = smul.addr %s212, 16
        %s214 = scalar_lea.vmem [#allocation7], %s213
        %s215 = smul.u32 2, %s27
        %s216 = smul.u32 2, %s27
        %v217 = vld [vmem:[%s180] sm:$0xff]
        %v218 = vld [vmem:[%s189] sm:$0xff]
        %v219 = vadd.f32 %v217, %v218
        %220 = vst [vmem:[%s214] sm:$0xff] %v219
        %v221 = vld [vmem:[%s180 + $0x8] sm:$0xff]
        %v222 = vld [vmem:[%s189] sm:$0xff]
        %v223 = vadd.f32 %v221, %v222
        %224 = vst [vmem:[%s214 + $0x8] sm:$0xff] %v223
        %s225 = sand.u32 %s98, 1
        %s226 = scalar_lea.sflag [#allocation4], %s225
        %s227 = sand.u32 %s98, 1
        %s228 = smul.addr %s227, 16
        %s229 = scalar_lea.vmem [#allocation7], %s228
        // Predicated region
        $region37: #{tpu_custom_call.1} parent=27 // pred_check
          %p230 = pneg %p108
        $region38: #{tpu_custom_call.1} parent=27 // pred_check_branch
          %232 = sbr.rel (%p230) target = $region40
        $region39: #{tpu_custom_call.1} parent=27 // pred_region
          %s233 = smul.u32 2, %s27
          %s235 = ssub.s32 256, 256
          %236 = vsyncadd %s226, %s235
          %s237 = smul.addr %s26, 2
          %s238 = sadd.s32 %s233, %s237
          %s239 = smul.addr %s238, 128
          %s240 = scalar_lea.hbm %s2, %s239
          %s242 = sshll.u32 %s229, 4
          %s243 = int_to_ptr.vmem [resolvable:$true] %s242
          %245 = dma.vmem_to_hbm [thread:$0]  %s243, 256, %s240, %s226
        $region40: #{tpu_custom_call.1} parent=27 // pred_fallthru
          _
      $region28: #{tpu_custom_call.1} parent=5 // pred_fallthru
        _
      %p246 = scmp.le.s32.totalorder 2, %s17
      // Predicated region
      $region41: #{tpu_custom_call.1} parent=5 // pred_check
        %p247 = pneg %p246
      $region42: #{tpu_custom_call.1} parent=5 // pred_check_branch
        %249 = sbr.rel (%p247) target = $region44
      $region43: #{tpu_custom_call.1} parent=5 // pred_region
        %s250 = ssub.s32 %s17, 2
        // Predicated region
        $region45: #{tpu_custom_call.1} parent=43 // pred_check
          %p251 = pneg %p114
        $region46: #{tpu_custom_call.1} parent=43 // pred_check_branch
          %253 = sbr.rel (%p251) target = $region48
        $region47: #{tpu_custom_call.1} parent=43 // pred_region
          %s254 = sand.u32 %s99, 1
          %s255 = scalar_lea.sflag [#allocation4], %s254
          %s256 = sand.u32 %s99, 1
          %s257 = smul.addr %s256, 16
          %s258 = scalar_lea.vmem [#allocation7], %s257
          %259 = dma.done %s255, 256
        $region48: #{tpu_custom_call.1} parent=43 // pred_fallthru
          _
      $region44: #{tpu_custom_call.1} parent=5 // pred_fallthru
        _
    $region6: #{tpu_custom_call.1} parent=1 // loop_footer
      %s21 = sadd.s32 1, %s17
    $region7: #{tpu_custom_call.1} parent=1 // loop_footer_branch
      %16 = sbr.rel target = $region3
    $region8: #{tpu_custom_call.1} parent=1 // loop_exit
      _
    %260 = vsyncpa [#allocation3], 1
    %s261 = scalar_lea.sflag [#allocation3], 1
    %262 = vsyncpa %s261, 1
    %263 = vsyncpa [#allocation6], 1
    %s264 = scalar_lea.sflag [#allocation6], 1
    %265 = vsyncpa %s264, 1
    %266 = vsyncpa [#allocation4], 1
    %s267 = scalar_lea.sflag [#allocation4], 1
    %268 = vsyncpa %s267, 1

</llo_original>
